<compile_context>
chip_gen: v6e
topology: v6e:2x2x1
jax: 0.10.0
libtpu: 0.0.40
codegen_flags: <defaults>
</compile_context>

<pallas_src>
import jax
import jax.numpy as jnp
from jax.experimental import pallas as pl
from jax.experimental.pallas import tpu as pltpu

input_size = 784
hidden_size = 500
num_classes = 10  # defined on the module, unused by forward()

_TM = 256  # batch tile when gridding over the batch (large-B path)


def linear_kernel(x_ref, w_ref, b_ref, o_ref):
    # f32 x f32 matmul on the MXU, f32 accumulate, f32 bias add on the VPU.
    acc = jnp.dot(x_ref[...], w_ref[...], preferred_element_type=jnp.float32)
    o_ref[...] = (acc + b_ref[...]).astype(o_ref.dtype)


def _neural_net_forward(x, w1_t, b1):
    """out = x @ W1^T + b1  (== nn.Linear(input_size, hidden_size)(x)).

    x:    (B, input_size)            f32
    w1_t: (input_size, hidden_size)  f32  (pre-transposed vs. PyTorch storage)
    b1:   (1, hidden_size)           f32
    returns: (B, hidden_size) f32
    """
    B, K = x.shape
    N = w1_t.shape[1]

    cost = pl.CostEstimate(
        flops=2 * B * K * N,
        bytes_accessed=(B * K + K * N + N + B * N) * 4,
        transcendentals=0,
    )

    if B <= _TM:
        # Single full-array block: total residency is ~2 MB f32, far under
        # VMEM on every generation (incl. v7x's 64 MiB). No grid, no padding,
        # no wrapper ops.
        return pl.pallas_call(
            linear_kernel,
            out_shape=jax.ShapeDtypeStruct((B, N), jnp.float32),
            in_specs=[
                pl.BlockSpec((B, K), lambda: (0, 0)),
                pl.BlockSpec((K, N), lambda: (0, 0)),
                pl.BlockSpec((1, N), lambda: (0, 0)),
            ],
            out_specs=pl.BlockSpec((B, N), lambda: (0, 0)),
            cost_estimate=cost,
        )(x, w1_t, b1)

    # Large batch: grid over the batch. The weight block index is constant
    # across the grid, so Pallas fetches the ~1.6 MB weight from HBM once and
    # keeps it resident in VMEM while (TM, K) activation tiles stream through.
    grid = (pl.cdiv(B, _TM),)
    return pl.pallas_call(
        linear_kernel,
        out_shape=jax.ShapeDtypeStruct((B, N), jnp.float32),
        grid=grid,
        in_specs=[
            pl.BlockSpec((_TM, K), lambda i: (i, 0)),
            pl.BlockSpec((K, N), lambda i: (0, 0)),
            pl.BlockSpec((1, N), lambda i: (0, 0)),
        ],
        out_specs=pl.BlockSpec((_TM, N), lambda i: (i, 0)),
        compiler_params=pltpu.CompilerParams(
            dimension_semantics=("parallel",),  # batch tiles are independent
        ),
        cost_estimate=cost,
    )(x, w1_t, b1)


neural_net_forward = jax.jit(_neural_net_forward)


def init_params(key):
    """Mimics PyTorch nn.Linear default init: U(-1/sqrt(fan_in), 1/sqrt(fan_in))."""
    k_w1, k_b1 = jax.random.split(key, 2)
    bound1 = 1.0 / jnp.sqrt(jnp.float32(input_size))

    # Stored transposed relative to PyTorch's (out_features, in_features)
    # layout so the kernel does x @ w1_t with no in-kernel transpose.
    w1_t = jax.random.uniform(
        k_w1, (input_size, hidden_size), jnp.float32, -bound1, bound1
    )
    b1 = jax.random.uniform(
        k_b1, (1, hidden_size), jnp.float32, -bound1, bound1
    )
    return w1_t, b1


if __name__ == "__main__":
    key = jax.random.PRNGKey(0)
    k_params, k_x1, k_x2 = jax.random.split(key, 3)

    w1_t, b1 = init_params(k_params)

    # Small batch -> single-block (gridless) path.
    batch = 8
    x = jax.random.normal(k_x1, (batch, input_size), jnp.float32)
    out = jax.block_until_ready(neural_net_forward(x, w1_t, b1))

    ref = x @ w1_t + b1
    assert out.shape == (batch, hidden_size)
    assert jnp.allclose(out, ref, atol=2e-2, rtol=2e-2), float(
        jnp.max(jnp.abs(out - ref))
    )

    # Larger batch -> batch-grid path (weight stays resident across tiles).
    big_batch = 512
    x_big = jax.random.normal(k_x2, (big_batch, input_size), jnp.float32)
    out_big = jax.block_until_ready(neural_net_forward(x_big, w1_t, b1))

    ref_big = x_big @ w1_t + b1
    assert out_big.shape == (big_batch, hidden_size)
    assert jnp.allclose(out_big, ref_big, atol=2e-2, rtol=2e-2), float(
        jnp.max(jnp.abs(out_big - ref_big))
    )

    print("KERNEL_OK")
</pallas_src>

<mosaic_0001>
module attributes {stable_mosaic.version = 11 : i64} {
  func.func @linear_kernel(%arg0: memref<8x784xf32, #tpu.memory_space<vmem>>, %arg1: memref<784x500xf32, #tpu.memory_space<vmem>>, %arg2: memref<1x500xf32, #tpu.memory_space<vmem>>, %arg3: memref<8x500xf32, #tpu.memory_space<vmem>>) attributes {dimension_semantics = [], scalar_prefetch = 0 : i64, scratch_operands = 0 : i64, tpu.core_type = #tpu.core_type<tc>} {
    %c0 = arith.constant 0 : index
    %c0_0 = arith.constant 0 : index
    %0 = vector.load %arg0[%c0, %c0_0] : memref<8x784xf32, #tpu.memory_space<vmem>>, vector<8x784xf32>
    %c0_1 = arith.constant 0 : index
    %c0_2 = arith.constant 0 : index
    %1 = vector.load %arg1[%c0_1, %c0_2] : memref<784x500xf32, #tpu.memory_space<vmem>>, vector<784x500xf32>
    %cst = arith.constant dense<0.000000e+00> : vector<8x500xf32>
    %2 = tpu.matmul %0, %1, %cst {dimension_numbers = #tpu.dot_dimension_numbers<[1], [0], [0], [1], [0, 0, 1, 1], [], []>} : vector<8x784xf32>, vector<784x500xf32>, vector<8x500xf32> -> vector<8x500xf32>
    %c0_3 = arith.constant 0 : index
    %c0_4 = arith.constant 0 : index
    %3 = vector.load %arg2[%c0_3, %c0_4] : memref<1x500xf32, #tpu.memory_space<vmem>>, vector<1x500xf32>
    %4 = vector.broadcast %3 : vector<1x500xf32> to vector<8x500xf32>
    %5 = arith.addf %2, %4 : vector<8x500xf32>
    %c0_5 = arith.constant 0 : index
    %c0_6 = arith.constant 0 : index
    %6 = vector.load %arg3[%c0_5, %c0_6] : memref<8x500xf32, #tpu.memory_space<vmem>>, vector<8x500xf32>
    tpu.vector_store %arg3[%c0_5, %c0_6], %5 {strides = array<i32>} : memref<8x500xf32, #tpu.memory_space<vmem>>, vector<8x500xf32>,
    return
  }
}

</mosaic_0001>

<llo_original>
// kernel: _neural_net_forward.1
$region0: #{_neural_net_forward.1}
  #allocation0 [shape = 'u32[]', space=smem, size = 0x4, offset = 0x4, fixed_abs, tag = 'smem constant byte address 0x4 - core index']
  #allocation1 [shape = 'u32[144,128]{1,0:T(1,128)}', space=vmem, size = 0x12000, scoped, tag = 'internal scratch']
  %s0 = inlined_call_operand.hbm [shape: f32[8,784], index: 0, kind: input, shape index: {}]
  %s1 = inlined_call_operand.hbm [shape: f32[784,500], index: 1, kind: input, shape index: {}]
  %s2 = inlined_call_operand.hbm [shape: f32[1,500], index: 2, kind: input, shape index: {}]
  %s3 = inlined_call_operand.hbm [shape: f32[8,500], index: 3, kind: output, shape index: {}]
  %s4 = sld [smem:[#allocation0]]
  $region34: #{_neural_net_forward.1} parent=0
    _
  %s6 = ssub.s32 1, %s4
  %s7 = scalar_select 0, %s6, %s4
  $region1: #{_neural_net_forward.1} parent=0
    #allocation2 [shape = 'u8[28672]{0}', space=vmem, size = 0x7000, scoped, tag = 'input window, operand 0, single buffered']
    #allocation3 [shape = 's32[1]{0}', space=sflag, size = 0x4, scoped, tag = 'scoped memory for _neural_net_forward.1']
    #allocation4 [shape = 's32[1]{0}', space=sflag, size = 0x4, scoped, tag = 'scoped memory for _neural_net_forward.1']
    #allocation5 [shape = 'u8[1605632]{0}', space=vmem, size = 0x188000, scoped, tag = 'input window, operand 1, single buffered']
    #allocation6 [shape = 's32[1]{0}', space=sflag, size = 0x4, scoped, tag = 'scoped memory for _neural_net_forward.1']
    #allocation7 [shape = 'u8[2048]{0}', space=vmem, size = 0x800, scoped, tag = 'input window, operand 2, single buffered']
    #allocation8 [shape = 'u8[16384]{0}', space=vmem, size = 0x4000, scoped, tag = 'output window, operand 0, single buffered']
    %8 = vsyncpa [#allocation3], 0
    %9 = vsyncpa [#allocation6], 0
    %10 = vsyncpa [#allocation4], 0
    // Predicated region
    $region2: #{_neural_net_forward.1} parent=1 // pred_check
      _
    $region3: #{_neural_net_forward.1} parent=1 // pred_check_branch
      %12 = sbr.rel (0) target = $region5
    $region4: #{_neural_net_forward.1} parent=1 // pred_region
      %s14 = ssub.s32 896, 896
      %15 = vsyncadd [#allocation3], %s14
      %s17 = sshll.u32 [#allocation2], 4
      %s18 = int_to_ptr.vmem [resolvable:$true] %s17
      %20 = dma.hbm_to_vmem [thread:$0]  %s0, 896, %s18, [#allocation3]
    $region5: #{_neural_net_forward.1} parent=1 // pred_fallthru
      _
    // Predicated region
    $region6: #{_neural_net_forward.1} parent=1 // pred_check
      _
    $region7: #{_neural_net_forward.1} parent=1 // pred_check_branch
      %22 = sbr.rel (0) target = $region9
    $region8: #{_neural_net_forward.1} parent=1 // pred_region
      %s24 = ssub.s32 50176, 50176
      %25 = vsyncadd [#allocation6], %s24
      %s26 = sshll.u32 [#allocation5], 4
      %s27 = int_to_ptr.vmem [resolvable:$true] %s26
      %32 = dma.hbm_to_vmem [thread:$0]  %s1, 50176, %s27, [#allocation6], 512, 512, 32
    $region9: #{_neural_net_forward.1} parent=1 // pred_fallthru
      _
    // Predicated region
    $region10: #{_neural_net_forward.1} parent=1 // pred_check
      _
    $region11: #{_neural_net_forward.1} parent=1 // pred_check_branch
      %34 = sbr.rel (0) target = $region13
    $region12: #{_neural_net_forward.1} parent=1 // pred_region
      %s36 = ssub.s32 64, 64
      %37 = vsyncadd [#allocation6], %s36
      %s39 = sshll.u32 [#allocation7], 4
      %s40 = int_to_ptr.vmem [resolvable:$true] %s39
      %42 = dma.hbm_to_vmem [thread:$0]  %s2, 64, %s40, [#allocation6]
    $region13: #{_neural_net_forward.1} parent=1 // pred_fallthru
      _
    // Predicated region
    $region14: #{_neural_net_forward.1} parent=1 // pred_check
      _
    $region15: #{_neural_net_forward.1} parent=1 // pred_check_branch
      %44 = sbr.rel (0) target = $region17
    $region16: #{_neural_net_forward.1} parent=1 // pred_region
      %45 = dma.done [#allocation3], 896
    $region17: #{_neural_net_forward.1} parent=1 // pred_fallthru
      _
    // Predicated region
    $region18: #{_neural_net_forward.1} parent=1 // pred_check
      _
    $region19: #{_neural_net_forward.1} parent=1 // pred_check_branch
      %47 = sbr.rel (0) target = $region21
    $region20: #{_neural_net_forward.1} parent=1 // pred_region
      %48 = dma.done [#allocation6], 50176
    $region21: #{_neural_net_forward.1} parent=1 // pred_fallthru
      _
    // Predicated region
    $region22: #{_neural_net_forward.1} parent=1 // pred_check
      _
    $region23: #{_neural_net_forward.1} parent=1 // pred_check_branch
      %50 = sbr.rel (0) target = $region25
    $region24: #{_neural_net_forward.1} parent=1 // pred_region
      %51 = dma.done [#allocation6], 64
    $region25: #{_neural_net_forward.1} parent=1 // pred_fallthru
      _
    %v52 = vld [vmem:[#allocation2] sm:$0xff]
    %v53 = vld [vmem:[#allocation2 + $0x8] sm:$0xff]
    %v54 = vld [vmem:[#allocation2 + $0x10] sm:$0xff]
    %v55 = vld [vmem:[#allocation2 + $0x18] sm:$0xff]
    %v56 = vld [vmem:[#allocation2 + $0x20] sm:$0xff]
    %v57 = vld [vmem:[#allocation2 + $0x28] sm:$0xff]
    %v58 = vld [vmem:[#allocation2 + $0x30] sm:$0xff]
    %v59 = vld [vmem:[#allocation5] sm:$0xff]
    %v60 = vld [vmem:[#allocation5 + $0x8] sm:$0xff]
    %v61 = vld [vmem:[#allocation5 + $0x10] sm:$0xff]
    %v62 = vld [vmem:[#allocation5 + $0x18] sm:$0xff]
    %v63 = vld [vmem:[#allocation5 + $0x20] sm:$0xff]
    %v64 = vld [vmem:[#allocation5 + $0x28] sm:$0xff]
    %v65 = vld [vmem:[#allocation5 + $0x30] sm:$0xff]
    %v66 = vld [vmem:[#allocation5 + $0x38] sm:$0xff]
    %v67 = vld [vmem:[#allocation5 + $0x40] sm:$0xff]
    %v68 = vld [vmem:[#allocation5 + $0x48] sm:$0xff]
    %v69 = vld [vmem:[#allocation5 + $0x50] sm:$0xff]
    %v70 = vld [vmem:[#allocation5 + $0x58] sm:$0xff]
    %v71 = vld [vmem:[#allocation5 + $0x60] sm:$0xff]
    %v72 = vld [vmem:[#allocation5 + $0x68] sm:$0xff]
    %v73 = vld [vmem:[#allocation5 + $0x70] sm:$0xff]
    %v74 = vld [vmem:[#allocation5 + $0x78] sm:$0xff]
    %v75 = vld [vmem:[#allocation5 + $0x80] sm:$0xff]
    %v76 = vld [vmem:[#allocation5 + $0x88] sm:$0xff]
    %v77 = vld [vmem:[#allocation5 + $0x90] sm:$0xff]
    %v78 = vld [vmem:[#allocation5 + $0x98] sm:$0xff]
    %v79 = vld [vmem:[#allocation5 + $0xa0] sm:$0xff]
    %v80 = vld [vmem:[#allocation5 + $0xa8] sm:$0xff]
    %v81 = vld [vmem:[#allocation5 + $0xb0] sm:$0xff]
    %v82 = vld [vmem:[#allocation5 + $0xb8] sm:$0xff]
    %v83 = vld [vmem:[#allocation5 + $0xc0] sm:$0xff]
    %v84 = vld [vmem:[#allocation5 + $0xc8] sm:$0xff]
    %v85 = vld [vmem:[#allocation5 + $0xd0] sm:$0xff]
    %v86 = vld [vmem:[#allocation5 + $0xd8] sm:$0xff]
    %v87 = vld [vmem:[#allocation5 + $0xe0] sm:$0xff]
    %v88 = vld [vmem:[#allocation5 + $0xe8] sm:$0xff]
    %v89 = vld [vmem:[#allocation5 + $0xf0] sm:$0xff]
    %v90 = vld [vmem:[#allocation5 + $0xf8] sm:$0xff]
    %v91 = vld [vmem:[#allocation5 + $0x100] sm:$0xff]
    %v92 = vld [vmem:[#allocation5 + $0x108] sm:$0xff]
    %v93 = vld [vmem:[#allocation5 + $0x110] sm:$0xff]
    %v94 = vld [vmem:[#allocation5 + $0x118] sm:$0xff]
    %v95 = vld [vmem:[#allocation5 + $0x120] sm:$0xff]
    %v96 = vld [vmem:[#allocation5 + $0x128] sm:$0xff]
    %v97 = vld [vmem:[#allocation5 + $0x130] sm:$0xff]
    %v98 = vld [vmem:[#allocation5 + $0x138] sm:$0xff]
    %v99 = vld [vmem:[#allocation5 + $0x140] sm:$0xff]
    %v100 = vld [vmem:[#allocation5 + $0x148] sm:$0xff]
    %v101 = vld [vmem:[#allocation5 + $0x150] sm:$0xff]
    %v102 = vld [vmem:[#allocation5 + $0x158] sm:$0xff]
    %v103 = vld [vmem:[#allocation5 + $0x160] sm:$0xff]
    %v104 = vld [vmem:[#allocation5 + $0x168] sm:$0xff]
    %v105 = vld [vmem:[#allocation5 + $0x170] sm:$0xff]
    %v106 = vld [vmem:[#allocation5 + $0x178] sm:$0xff]
    %v107 = vld [vmem:[#allocation5 + $0x180] sm:$0xff]
    %v108 = vld [vmem:[#allocation5 + $0x188] sm:$0xff]
    %v109 = vld [vmem:[#allocation5 + $0x190] sm:$0xff]
    %v110 = vld [vmem:[#allocation5 + $0x198] sm:$0xff]
    %v111 = vld [vmem:[#allocation5 + $0x1a0] sm:$0xff]
    %v112 = vld [vmem:[#allocation5 + $0x1a8] sm:$0xff]
    %v113 = vld [vmem:[#allocation5 + $0x1b0] sm:$0xff]
    %v114 = vld [vmem:[#allocation5 + $0x1b8] sm:$0xff]
    %v115 = vld [vmem:[#allocation5 + $0x1c0] sm:$0xff]
    %v116 = vld [vmem:[#allocation5 + $0x1c8] sm:$0xff]
    %v117 = vld [vmem:[#allocation5 + $0x1d0] sm:$0xff]
    %v118 = vld [vmem:[#allocation5 + $0x1d8] sm:$0xff]
    %v119 = vld [vmem:[#allocation5 + $0x1e0] sm:$0xff]
    %v120 = vld [vmem:[#allocation5 + $0x1e8] sm:$0xff]
    %v121 = vld [vmem:[#allocation5 + $0x1f0] sm:$0xff]
    %v122 = vld [vmem:[#allocation5 + $0x1f8] sm:$0xff]
    %v123 = vld [vmem:[#allocation5 + $0x200] sm:$0xff]
    %v124 = vld [vmem:[#allocation5 + $0x208] sm:$0xff]
    %v125 = vld [vmem:[#allocation5 + $0x210] sm:$0xff]
    %v126 = vld [vmem:[#allocation5 + $0x218] sm:$0xff]
    %v127 = vld [vmem:[#allocation5 + $0x220] sm:$0xff]
    %v128 = vld [vmem:[#allocation5 + $0x228] sm:$0xff]
    %v129 = vld [vmem:[#allocation5 + $0x230] sm:$0xff]
    %v130 = vld [vmem:[#allocation5 + $0x238] sm:$0xff]
    %v131 = vld [vmem:[#allocation5 + $0x240] sm:$0xff]
    %v132 = vld [vmem:[#allocation5 + $0x248] sm:$0xff]
    %v133 = vld [vmem:[#allocation5 + $0x250] sm:$0xff]
    %v134 = vld [vmem:[#allocation5 + $0x258] sm:$0xff]
    %v135 = vld [vmem:[#allocation5 + $0x260] sm:$0xff]
    %v136 = vld [vmem:[#allocation5 + $0x268] sm:$0xff]
    %v137 = vld [vmem:[#allocation5 + $0x270] sm:$0xff]
    %v138 = vld [vmem:[#allocation5 + $0x278] sm:$0xff]
    %v139 = vld [vmem:[#allocation5 + $0x280] sm:$0xff]
    %v140 = vld [vmem:[#allocation5 + $0x288] sm:$0xff]
    %v141 = vld [vmem:[#allocation5 + $0x290] sm:$0xff]
    %v142 = vld [vmem:[#allocation5 + $0x298] sm:$0xff]
    %v143 = vld [vmem:[#allocation5 + $0x2a0] sm:$0xff]
    %v144 = vld [vmem:[#allocation5 + $0x2a8] sm:$0xff]
    %v145 = vld [vmem:[#allocation5 + $0x2b0] sm:$0xff]
    %v146 = vld [vmem:[#allocation5 + $0x2b8] sm:$0xff]
    %v147 = vld [vmem:[#allocation5 + $0x2c0] sm:$0xff]
    %v148 = vld [vmem:[#allocation5 + $0x2c8] sm:$0xff]
    %v149 = vld [vmem:[#allocation5 + $0x2d0] sm:$0xff]
    %v150 = vld [vmem:[#allocation5 + $0x2d8] sm:$0xff]
    %v151 = vld [vmem:[#allocation5 + $0x2e0] sm:$0xff]
    %v152 = vld [vmem:[#allocation5 + $0x2e8] sm:$0xff]
    %v153 = vld [vmem:[#allocation5 + $0x2f0] sm:$0xff]
    %v154 = vld [vmem:[#allocation5 + $0x2f8] sm:$0xff]
    %v155 = vld [vmem:[#allocation5 + $0x300] sm:$0xff]
    %v156 = vld [vmem:[#allocation5 + $0x308] sm:$0xff]
    %v157 = vld [vmem:[#allocation5 + $0x310] sm:$0xff]
    %v158 = vld [vmem:[#allocation5 + $0x318] sm:$0xff]
    %v159 = vld [vmem:[#allocation5 + $0x320] sm:$0xff]
    %v160 = vld [vmem:[#allocation5 + $0x328] sm:$0xff]
    %v161 = vld [vmem:[#allocation5 + $0x330] sm:$0xff]
    %v162 = vld [vmem:[#allocation5 + $0x338] sm:$0xff]
    %v163 = vld [vmem:[#allocation5 + $0x340] sm:$0xff]
    %v164 = vld [vmem:[#allocation5 + $0x348] sm:$0xff]
    %v165 = vld [vmem:[#allocation5 + $0x350] sm:$0xff]
    %v166 = vld [vmem:[#allocation5 + $0x358] sm:$0xff]
    %v167 = vld [vmem:[#allocation5 + $0x360] sm:$0xff]
    %v168 = vld [vmem:[#allocation5 + $0x368] sm:$0xff]
    %v169 = vld [vmem:[#allocation5 + $0x370] sm:$0xff]
    %v170 = vld [vmem:[#allocation5 + $0x378] sm:$0xff]
    %v171 = vld [vmem:[#allocation5 + $0x380] sm:$0xff]
    %v172 = vld [vmem:[#allocation5 + $0x388] sm:$0xff]
    %v173 = vld [vmem:[#allocation5 + $0x390] sm:$0xff]
    %v174 = vld [vmem:[#allocation5 + $0x398] sm:$0xff]
    %v175 = vld [vmem:[#allocation5 + $0x3a0] sm:$0xff]
    %v176 = vld [vmem:[#allocation5 + $0x3a8] sm:$0xff]
    %v177 = vld [vmem:[#allocation5 + $0x3b0] sm:$0xff]
    %v178 = vld [vmem:[#allocation5 + $0x3b8] sm:$0xff]
    %v179 = vld [vmem:[#allocation5 + $0x3c0] sm:$0xff]
    %v180 = vld [vmem:[#allocation5 + $0x3c8] sm:$0xff]
    %v181 = vld [vmem:[#allocation5 + $0x3d0] sm:$0xff]
    %v182 = vld [vmem:[#allocation5 + $0x3d8] sm:$0xff]
    %v183 = vld [vmem:[#allocation5 + $0x3e0] sm:$0xff]
    %v184 = vld [vmem:[#allocation5 + $0x3e8] sm:$0xff]
    %v185 = vld [vmem:[#allocation5 + $0x3f0] sm:$0xff]
    %v186 = vld [vmem:[#allocation5 + $0x3f8] sm:$0xff]
    %v187 = vld [vmem:[#allocation5 + $0x400] sm:$0xff]
    %v188 = vld [vmem:[#allocation5 + $0x408] sm:$0xff]
    %v189 = vld [vmem:[#allocation5 + $0x410] sm:$0xff]
    %v190 = vld [vmem:[#allocation5 + $0x418] sm:$0xff]
    %v191 = vld [vmem:[#allocation5 + $0x420] sm:$0xff]
    %v192 = vld [vmem:[#allocation5 + $0x428] sm:$0xff]
    %v193 = vld [vmem:[#allocation5 + $0x430] sm:$0xff]
    %v194 = vld [vmem:[#allocation5 + $0x438] sm:$0xff]
    %v195 = vld [vmem:[#allocation5 + $0x440] sm:$0xff]
    %v196 = vld [vmem:[#allocation5 + $0x448] sm:$0xff]
    %v197 = vld [vmem:[#allocation5 + $0x450] sm:$0xff]
    %v198 = vld [vmem:[#allocation5 + $0x458] sm:$0xff]
    %v199 = vld [vmem:[#allocation5 + $0x460] sm:$0xff]
    %v200 = vld [vmem:[#allocation5 + $0x468] sm:$0xff]
    %v201 = vld [vmem:[#allocation5 + $0x470] sm:$0xff]
    %v202 = vld [vmem:[#allocation5 + $0x478] sm:$0xff]
    %v203 = vld [vmem:[#allocation5 + $0x480] sm:$0xff]
    %v204 = vld [vmem:[#allocation5 + $0x488] sm:$0xff]
    %v205 = vld [vmem:[#allocation5 + $0x490] sm:$0xff]
    %v206 = vld [vmem:[#allocation5 + $0x498] sm:$0xff]
    %v207 = vld [vmem:[#allocation5 + $0x4a0] sm:$0xff]
    %v208 = vld [vmem:[#allocation5 + $0x4a8] sm:$0xff]
    %v209 = vld [vmem:[#allocation5 + $0x4b0] sm:$0xff]
    %v210 = vld [vmem:[#allocation5 + $0x4b8] sm:$0xff]
    %v211 = vld [vmem:[#allocation5 + $0x4c0] sm:$0xff]
    %v212 = vld [vmem:[#allocation5 + $0x4c8] sm:$0xff]
    %v213 = vld [vmem:[#allocation5 + $0x4d0] sm:$0xff]
    %v214 = vld [vmem:[#allocation5 + $0x4d8] sm:$0xff]
    %v215 = vld [vmem:[#allocation5 + $0x4e0] sm:$0xff]
    %v216 = vld [vmem:[#allocation5 + $0x4e8] sm:$0xff]
    %v217 = vld [vmem:[#allocation5 + $0x4f0] sm:$0xff]
    %v218 = vld [vmem:[#allocation5 + $0x4f8] sm:$0xff]
    %v219 = vld [vmem:[#allocation5 + $0x500] sm:$0xff]
    %v220 = vld [vmem:[#allocation5 + $0x508] sm:$0xff]
    %v221 = vld [vmem:[#allocation5 + $0x510] sm:$0xff]
    %v222 = vld [vmem:[#allocation5 + $0x518] sm:$0xff]
    %v223 = vld [vmem:[#allocation5 + $0x520] sm:$0xff]
    %v224 = vld [vmem:[#allocation5 + $0x528] sm:$0xff]
    %v225 = vld [vmem:[#allocation5 + $0x530] sm:$0xff]
    %v226 = vld [vmem:[#allocation5 + $0x538] sm:$0xff]
    %v227 = vld [vmem:[#allocation5 + $0x540] sm:$0xff]
    %v228 = vld [vmem:[#allocation5 + $0x548] sm:$0xff]
    %v229 = vld [vmem:[#allocation5 + $0x550] sm:$0xff]
    %v230 = vld [vmem:[#allocation5 + $0x558] sm:$0xff]
    %v231 = vld [vmem:[#allocation5 + $0x560] sm:$0xff]
    %v232 = vld [vmem:[#allocation5 + $0x568] sm:$0xff]
    %v233 = vld [vmem:[#allocation5 + $0x570] sm:$0xff]
    %v234 = vld [vmem:[#allocation5 + $0x578] sm:$0xff]
    %v235 = vld [vmem:[#allocation5 + $0x580] sm:$0xff]
    %v236 = vld [vmem:[#allocation5 + $0x588] sm:$0xff]
    %v237 = vld [vmem:[#allocation5 + $0x590] sm:$0xff]
    %v238 = vld [vmem:[#allocation5 + $0x598] sm:$0xff]
    %v239 = vld [vmem:[#allocation5 + $0x5a0] sm:$0xff]
    %v240 = vld [vmem:[#allocation5 + $0x5a8] sm:$0xff]
    %v241 = vld [vmem:[#allocation5 + $0x5b0] sm:$0xff]
    %v242 = vld [vmem:[#allocation5 + $0x5b8] sm:$0xff]
    %v243 = vld [vmem:[#allocation5 + $0x5c0] sm:$0xff]
    %v244 = vld [vmem:[#allocation5 + $0x5c8] sm:$0xff]
    %v245 = vld [vmem:[#allocation5 + $0x5d0] sm:$0xff]
    %v246 = vld [vmem:[#allocation5 + $0x5d8] sm:$0xff]
    %v247 = vld [vmem:[#allocation5 + $0x5e0] sm:$0xff]
    %v248 = vld [vmem:[#allocation5 + $0x5e8] sm:$0xff]
    %v249 = vld [vmem:[#allocation5 + $0x5f0] sm:$0xff]
    %v250 = vld [vmem:[#allocation5 + $0x5f8] sm:$0xff]
    %v251 = vld [vmem:[#allocation5 + $0x600] sm:$0xff]
    %v252 = vld [vmem:[#allocation5 + $0x608] sm:$0xff]
    %v253 = vld [vmem:[#allocation5 + $0x610] sm:$0xff]
    %v254 = vld [vmem:[#allocation5 + $0x618] sm:$0xff]
    %v255 = vld [vmem:[#allocation5 + $0x620] sm:$0xff]
    %v256 = vld [vmem:[#allocation5 + $0x628] sm:$0xff]
    %v257 = vld [vmem:[#allocation5 + $0x630] sm:$0xff]
    %v258 = vld [vmem:[#allocation5 + $0x638] sm:$0xff]
    %v259 = vld [vmem:[#allocation5 + $0x640] sm:$0xff]
    %v260 = vld [vmem:[#allocation5 + $0x648] sm:$0xff]
    %v261 = vld [vmem:[#allocation5 + $0x650] sm:$0xff]
    %v262 = vld [vmem:[#allocation5 + $0x658] sm:$0xff]
    %v263 = vld [vmem:[#allocation5 + $0x660] sm:$0xff]
    %v264 = vld [vmem:[#allocation5 + $0x668] sm:$0xff]
    %v265 = vld [vmem:[#allocation5 + $0x670] sm:$0xff]
    %v266 = vld [vmem:[#allocation5 + $0x678] sm:$0xff]
    %v267 = vld [vmem:[#allocation5 + $0x680] sm:$0xff]
    %v268 = vld [vmem:[#allocation5 + $0x688] sm:$0xff]
    %v269 = vld [vmem:[#allocation5 + $0x690] sm:$0xff]
    %v270 = vld [vmem:[#allocation5 + $0x698] sm:$0xff]
    %v271 = vld [vmem:[#allocation5 + $0x6a0] sm:$0xff]
    %v272 = vld [vmem:[#allocation5 + $0x6a8] sm:$0xff]
    %v273 = vld [vmem:[#allocation5 + $0x6b0] sm:$0xff]
    %v274 = vld [vmem:[#allocation5 + $0x6b8] sm:$0xff]
    %v275 = vld [vmem:[#allocation5 + $0x6c0] sm:$0xff]
    %v276 = vld [vmem:[#allocation5 + $0x6c8] sm:$0xff]
    %v277 = vld [vmem:[#allocation5 + $0x6d0] sm:$0xff]
    %v278 = vld [vmem:[#allocation5 + $0x6d8] sm:$0xff]
    %v279 = vld [vmem:[#allocation5 + $0x6e0] sm:$0xff]
    %v280 = vld [vmem:[#allocation5 + $0x6e8] sm:$0xff]
    %v281 = vld [vmem:[#allocation5 + $0x6f0] sm:$0xff]
    %v282 = vld [vmem:[#allocation5 + $0x6f8] sm:$0xff]
    %v283 = vld [vmem:[#allocation5 + $0x700] sm:$0xff]
    %v284 = vld [vmem:[#allocation5 + $0x708] sm:$0xff]
    %v285 = vld [vmem:[#allocation5 + $0x710] sm:$0xff]
    %v286 = vld [vmem:[#allocation5 + $0x718] sm:$0xff]
    %v287 = vld [vmem:[#allocation5 + $0x720] sm:$0xff]
    %v288 = vld [vmem:[#allocation5 + $0x728] sm:$0xff]
    %v289 = vld [vmem:[#allocation5 + $0x730] sm:$0xff]
    %v290 = vld [vmem:[#allocation5 + $0x738] sm:$0xff]
    %v291 = vld [vmem:[#allocation5 + $0x740] sm:$0xff]
    %v292 = vld [vmem:[#allocation5 + $0x748] sm:$0xff]
    %v293 = vld [vmem:[#allocation5 + $0x750] sm:$0xff]
    %v294 = vld [vmem:[#allocation5 + $0x758] sm:$0xff]
    %v295 = vld [vmem:[#allocation5 + $0x760] sm:$0xff]
    %v296 = vld [vmem:[#allocation5 + $0x768] sm:$0xff]
    %v297 = vld [vmem:[#allocation5 + $0x770] sm:$0xff]
    %v298 = vld [vmem:[#allocation5 + $0x778] sm:$0xff]
    %v299 = vld [vmem:[#allocation5 + $0x780] sm:$0xff]
    %v300 = vld [vmem:[#allocation5 + $0x788] sm:$0xff]
    %v301 = vld [vmem:[#allocation5 + $0x790] sm:$0xff]
    %v302 = vld [vmem:[#allocation5 + $0x798] sm:$0xff]
    %v303 = vld [vmem:[#allocation5 + $0x7a0] sm:$0xff]
    %v304 = vld [vmem:[#allocation5 + $0x7a8] sm:$0xff]
    %v305 = vld [vmem:[#allocation5 + $0x7b0] sm:$0xff]
    %v306 = vld [vmem:[#allocation5 + $0x7b8] sm:$0xff]
    %v307 = vld [vmem:[#allocation5 + $0x7c0] sm:$0xff]
    %v308 = vld [vmem:[#allocation5 + $0x7c8] sm:$0xff]
    %v309 = vld [vmem:[#allocation5 + $0x7d0] sm:$0xff]
    %v310 = vld [vmem:[#allocation5 + $0x7d8] sm:$0xff]
    %v311 = vld [vmem:[#allocation5 + $0x7e0] sm:$0xff]
    %v312 = vld [vmem:[#allocation5 + $0x7e8] sm:$0xff]
    %v313 = vld [vmem:[#allocation5 + $0x7f0] sm:$0xff]
    %v314 = vld [vmem:[#allocation5 + $0x7f8] sm:$0xff]
    %v315 = vld [vmem:[#allocation5 + $0x800] sm:$0xff]
    %v316 = vld [vmem:[#allocation5 + $0x808] sm:$0xff]
    %v317 = vld [vmem:[#allocation5 + $0x810] sm:$0xff]
    %v318 = vld [vmem:[#allocation5 + $0x818] sm:$0xff]
    %v319 = vld [vmem:[#allocation5 + $0x820] sm:$0xff]
    %v320 = vld [vmem:[#allocation5 + $0x828] sm:$0xff]
    %v321 = vld [vmem:[#allocation5 + $0x830] sm:$0xff]
    %v322 = vld [vmem:[#allocation5 + $0x838] sm:$0xff]
    %v323 = vld [vmem:[#allocation5 + $0x840] sm:$0xff]
    %v324 = vld [vmem:[#allocation5 + $0x848] sm:$0xff]
    %v325 = vld [vmem:[#allocation5 + $0x850] sm:$0xff]
    %v326 = vld [vmem:[#allocation5 + $0x858] sm:$0xff]
    %v327 = vld [vmem:[#allocation5 + $0x860] sm:$0xff]
    %v328 = vld [vmem:[#allocation5 + $0x868] sm:$0xff]
    %v329 = vld [vmem:[#allocation5 + $0x870] sm:$0xff]
    %v330 = vld [vmem:[#allocation5 + $0x878] sm:$0xff]
    %v331 = vld [vmem:[#allocation5 + $0x880] sm:$0xff]
    %v332 = vld [vmem:[#allocation5 + $0x888] sm:$0xff]
    %v333 = vld [vmem:[#allocation5 + $0x890] sm:$0xff]
    %v334 = vld [vmem:[#allocation5 + $0x898] sm:$0xff]
    %v335 = vld [vmem:[#allocation5 + $0x8a0] sm:$0xff]
    %v336 = vld [vmem:[#allocation5 + $0x8a8] sm:$0xff]
    %v337 = vld [vmem:[#allocation5 + $0x8b0] sm:$0xff]
    %v338 = vld [vmem:[#allocation5 + $0x8b8] sm:$0xff]
    %v339 = vld [vmem:[#allocation5 + $0x8c0] sm:$0xff]
    %v340 = vld [vmem:[#allocation5 + $0x8c8] sm:$0xff]
    %v341 = vld [vmem:[#allocation5 + $0x8d0] sm:$0xff]
    %v342 = vld [vmem:[#allocation5 + $0x8d8] sm:$0xff]
    %v343 = vld [vmem:[#allocation5 + $0x8e0] sm:$0xff]
    %v344 = vld [vmem:[#allocation5 + $0x8e8] sm:$0xff]
    %v345 = vld [vmem:[#allocation5 + $0x8f0] sm:$0xff]
    %v346 = vld [vmem:[#allocation5 + $0x8f8] sm:$0xff]
    %v347 = vld [vmem:[#allocation5 + $0x900] sm:$0xff]
    %v348 = vld [vmem:[#allocation5 + $0x908] sm:$0xff]
    %v349 = vld [vmem:[#allocation5 + $0x910] sm:$0xff]
    %v350 = vld [vmem:[#allocation5 + $0x918] sm:$0xff]
    %v351 = vld [vmem:[#allocation5 + $0x920] sm:$0xff]
    %v352 = vld [vmem:[#allocation5 + $0x928] sm:$0xff]
    %v353 = vld [vmem:[#allocation5 + $0x930] sm:$0xff]
    %v354 = vld [vmem:[#allocation5 + $0x938] sm:$0xff]
    %v355 = vld [vmem:[#allocation5 + $0x940] sm:$0xff]
    %v356 = vld [vmem:[#allocation5 + $0x948] sm:$0xff]
    %v357 = vld [vmem:[#allocation5 + $0x950] sm:$0xff]
    %v358 = vld [vmem:[#allocation5 + $0x958] sm:$0xff]
    %v359 = vld [vmem:[#allocation5 + $0x960] sm:$0xff]
    %v360 = vld [vmem:[#allocation5 + $0x968] sm:$0xff]
    %v361 = vld [vmem:[#allocation5 + $0x970] sm:$0xff]
    %v362 = vld [vmem:[#allocation5 + $0x978] sm:$0xff]
    %v363 = vld [vmem:[#allocation5 + $0x980] sm:$0xff]
    %v364 = vld [vmem:[#allocation5 + $0x988] sm:$0xff]
    %v365 = vld [vmem:[#allocation5 + $0x990] sm:$0xff]
    %v366 = vld [vmem:[#allocation5 + $0x998] sm:$0xff]
    %v367 = vld [vmem:[#allocation5 + $0x9a0] sm:$0xff]
    %v368 = vld [vmem:[#allocation5 + $0x9a8] sm:$0xff]
    %v369 = vld [vmem:[#allocation5 + $0x9b0] sm:$0xff]
    %v370 = vld [vmem:[#allocation5 + $0x9b8] sm:$0xff]
    %v371 = vld [vmem:[#allocation5 + $0x9c0] sm:$0xff]
    %v372 = vld [vmem:[#allocation5 + $0x9c8] sm:$0xff]
    %v373 = vld [vmem:[#allocation5 + $0x9d0] sm:$0xff]
    %v374 = vld [vmem:[#allocation5 + $0x9d8] sm:$0xff]
    %v375 = vld [vmem:[#allocation5 + $0x9e0] sm:$0xff]
    %v376 = vld [vmem:[#allocation5 + $0x9e8] sm:$0xff]
    %v377 = vld [vmem:[#allocation5 + $0x9f0] sm:$0xff]
    %v378 = vld [vmem:[#allocation5 + $0x9f8] sm:$0xff]
    %v379 = vld [vmem:[#allocation5 + $0xa00] sm:$0xff]
    %v380 = vld [vmem:[#allocation5 + $0xa08] sm:$0xff]
    %v381 = vld [vmem:[#allocation5 + $0xa10] sm:$0xff]
    %v382 = vld [vmem:[#allocation5 + $0xa18] sm:$0xff]
    %v383 = vld [vmem:[#allocation5 + $0xa20] sm:$0xff]
    %v384 = vld [vmem:[#allocation5 + $0xa28] sm:$0xff]
    %v385 = vld [vmem:[#allocation5 + $0xa30] sm:$0xff]
    %v386 = vld [vmem:[#allocation5 + $0xa38] sm:$0xff]
    %v387 = vld [vmem:[#allocation5 + $0xa40] sm:$0xff]
    %v388 = vld [vmem:[#allocation5 + $0xa48] sm:$0xff]
    %v389 = vld [vmem:[#allocation5 + $0xa50] sm:$0xff]
    %v390 = vld [vmem:[#allocation5 + $0xa58] sm:$0xff]
    %v391 = vld [vmem:[#allocation5 + $0xa60] sm:$0xff]
    %v392 = vld [vmem:[#allocation5 + $0xa68] sm:$0xff]
    %v393 = vld [vmem:[#allocation5 + $0xa70] sm:$0xff]
    %v394 = vld [vmem:[#allocation5 + $0xa78] sm:$0xff]
    %v395 = vld [vmem:[#allocation5 + $0xa80] sm:$0xff]
    %v396 = vld [vmem:[#allocation5 + $0xa88] sm:$0xff]
    %v397 = vld [vmem:[#allocation5 + $0xa90] sm:$0xff]
    %v398 = vld [vmem:[#allocation5 + $0xa98] sm:$0xff]
    %v399 = vld [vmem:[#allocation5 + $0xaa0] sm:$0xff]
    %v400 = vld [vmem:[#allocation5 + $0xaa8] sm:$0xff]
    %v401 = vld [vmem:[#allocation5 + $0xab0] sm:$0xff]
    %v402 = vld [vmem:[#allocation5 + $0xab8] sm:$0xff]
    %v403 = vld [vmem:[#allocation5 + $0xac0] sm:$0xff]
    %v404 = vld [vmem:[#allocation5 + $0xac8] sm:$0xff]
    %v405 = vld [vmem:[#allocation5 + $0xad0] sm:$0xff]
    %v406 = vld [vmem:[#allocation5 + $0xad8] sm:$0xff]
    %v407 = vld [vmem:[#allocation5 + $0xae0] sm:$0xff]
    %v408 = vld [vmem:[#allocation5 + $0xae8] sm:$0xff]
    %v409 = vld [vmem:[#allocation5 + $0xaf0] sm:$0xff]
    %v410 = vld [vmem:[#allocation5 + $0xaf8] sm:$0xff]
    %v411 = vld [vmem:[#allocation5 + $0xb00] sm:$0xff]
    %v412 = vld [vmem:[#allocation5 + $0xb08] sm:$0xff]
    %v413 = vld [vmem:[#allocation5 + $0xb10] sm:$0xff]
    %v414 = vld [vmem:[#allocation5 + $0xb18] sm:$0xff]
    %v415 = vld [vmem:[#allocation5 + $0xb20] sm:$0xff]
    %v416 = vld [vmem:[#allocation5 + $0xb28] sm:$0xff]
    %v417 = vld [vmem:[#allocation5 + $0xb30] sm:$0xff]
    %v418 = vld [vmem:[#allocation5 + $0xb38] sm:$0xff]
    %v419 = vld [vmem:[#allocation5 + $0xb40] sm:$0xff]
    %v420 = vld [vmem:[#allocation5 + $0xb48] sm:$0xff]
    %v421 = vld [vmem:[#allocation5 + $0xb50] sm:$0xff]
    %v422 = vld [vmem:[#allocation5 + $0xb58] sm:$0xff]
    %v423 = vld [vmem:[#allocation5 + $0xb60] sm:$0xff]
    %v424 = vld [vmem:[#allocation5 + $0xb68] sm:$0xff]
    %v425 = vld [vmem:[#allocation5 + $0xb70] sm:$0xff]
    %v426 = vld [vmem:[#allocation5 + $0xb78] sm:$0xff]
    %v427 = vld [vmem:[#allocation5 + $0xb80] sm:$0xff]
    %v428 = vld [vmem:[#allocation5 + $0xb88] sm:$0xff]
    %v429 = vld [vmem:[#allocation5 + $0xb90] sm:$0xff]
    %v430 = vld [vmem:[#allocation5 + $0xb98] sm:$0xff]
    %v431 = vld [vmem:[#allocation5 + $0xba0] sm:$0xff]
    %v432 = vld [vmem:[#allocation5 + $0xba8] sm:$0xff]
    %v433 = vld [vmem:[#allocation5 + $0xbb0] sm:$0xff]
    %v434 = vld [vmem:[#allocation5 + $0xbb8] sm:$0xff]
    %v435 = vld [vmem:[#allocation5 + $0xbc0] sm:$0xff]
    %v436 = vld [vmem:[#allocation5 + $0xbc8] sm:$0xff]
    %v437 = vld [vmem:[#allocation5 + $0xbd0] sm:$0xff]
    %v438 = vld [vmem:[#allocation5 + $0xbd8] sm:$0xff]
    %v439 = vld [vmem:[#allocation5 + $0xbe0] sm:$0xff]
    %v440 = vld [vmem:[#allocation5 + $0xbe8] sm:$0xff]
    %v441 = vld [vmem:[#allocation5 + $0xbf0] sm:$0xff]
    %v442 = vld [vmem:[#allocation5 + $0xbf8] sm:$0xff]
    %v443 = vld [vmem:[#allocation5 + $0xc00] sm:$0xff]
    %v444 = vld [vmem:[#allocation5 + $0xc08] sm:$0xff]
    %v445 = vld [vmem:[#allocation5 + $0xc10] sm:$0xff]
    %v446 = vld [vmem:[#allocation5 + $0xc18] sm:$0xff]
    %v447 = vld [vmem:[#allocation5 + $0xc20] sm:$0xff]
    %v448 = vld [vmem:[#allocation5 + $0xc28] sm:$0xff]
    %v449 = vld [vmem:[#allocation5 + $0xc30] sm:$0xff]
    %v450 = vld [vmem:[#allocation5 + $0xc38] sm:$0xff]
    %v451 = vld [vmem:[#allocation7] sm:$0xf]
    %v453 = vlaneseq
    %v454 = vshrl.u32 %v453, 7
    %v455 = vsub.s32 0, %v454
    %v456 = vrot.slane %v451, %v455
    %v457 = vlaneseq
    %v458 = vshrl.u32 %v457, 7
    %v459 = vsub.s32 1, %v458
    %v460 = vrot.slane %v451, %v459
    %v461 = vlaneseq
    %v462 = vshrl.u32 %v461, 7
    %v463 = vsub.s32 2, %v462
    %v464 = vrot.slane %v451, %v463
    %v465 = vlaneseq
    %v466 = vshrl.u32 %v465, 7
    %v467 = vsub.s32 3, %v466
    %v468 = vrot.slane %v451, %v467
    %vm473 = vcmask 130048
    %v475 = vsel %vm473, %v58, 0
    %477 = vmatprep.subr.mxu0 %v120
    %478 = vmatpush1.msra.mxu0 %v119
    %479 = vmatprep.subr.mxu0 %v116
    %480 = vmatpush1.msra.mxu0 %v115
    %481 = vmatprep.subr.mxu0 %v112
    %482 = vmatpush1.msra.mxu0 %v111
    %483 = vmatprep.subr.mxu0 %v108
    %484 = vmatpush1.msra.mxu0 %v107
    %485 = vmatprep.subr.mxu0 %v104
    %486 = vmatpush1.msra.mxu0 %v103
    %487 = vmatprep.subr.mxu0 %v100
    %488 = vmatpush1.msra.mxu0 %v99
    %489 = vmatprep.subr.mxu0 %v96
    %490 = vmatpush1.msra.mxu0 %v95
    %491 = vmatprep.subr.mxu0 %v92
    %492 = vmatpush1.msra.mxu0 %v91
    %493 = vmatprep.subr.mxu0 %v88
    %494 = vmatpush1.msra.mxu0 %v87
    %495 = vmatprep.subr.mxu0 %v84
    %496 = vmatpush1.msra.mxu0 %v83
    %497 = vmatprep.subr.mxu0 %v80
    %498 = vmatpush1.msra.mxu0 %v79
    %499 = vmatprep.subr.mxu0 %v76
    %500 = vmatpush1.msra.mxu0 %v75
    %501 = vmatprep.subr.mxu0 %v72
    %502 = vmatpush1.msra.mxu0 %v71
    %503 = vmatprep.subr.mxu0 %v68
    %504 = vmatpush1.msra.mxu0 %v67
    %505 = vmatprep.subr.mxu0 %v64
    %506 = vmatpush1.msra.mxu0 %v63
    %507 = vmatprep.subr.mxu0 %v60
    %508 = vmatpush1.msra.mxu0 %v59
    %509 = vmatprep.subr.mxu0 %v184
    %510 = vmatpush2.msra.mxu0 %v183
    %511 = vmatprep.subr.mxu0 %v180
    %512 = vmatpush2.msra.mxu0 %v179
    %513 = vmatprep.subr.mxu0 %v176
    %514 = vmatpush2.msra.mxu0 %v175
    %515 = vmatprep.subr.mxu0 %v172
    %516 = vmatpush2.msra.mxu0 %v171
    %517 = vmatprep.subr.mxu0 %v168
    %518 = vmatpush2.msra.mxu0 %v167
    %519 = vmatprep.subr.mxu0 %v164
    %520 = vmatpush2.msra.mxu0 %v163
    %521 = vmatprep.subr.mxu0 %v160
    %522 = vmatpush2.msra.mxu0 %v159
    %523 = vmatprep.subr.mxu0 %v156
    %524 = vmatpush2.msra.mxu0 %v155
    %525 = vmatprep.subr.mxu0 %v152
    %526 = vmatpush2.msra.mxu0 %v151
    %527 = vmatprep.subr.mxu0 %v148
    %528 = vmatpush2.msra.mxu0 %v147
    %529 = vmatprep.subr.mxu0 %v144
    %530 = vmatpush2.msra.mxu0 %v143
    %531 = vmatprep.subr.mxu0 %v140
    %532 = vmatpush2.msra.mxu0 %v139
    %533 = vmatprep.subr.mxu0 %v136
    %534 = vmatpush2.msra.mxu0 %v135
    %535 = vmatprep.subr.mxu0 %v132
    %536 = vmatpush2.msra.mxu0 %v131
    %537 = vmatprep.subr.mxu0 %v128
    %538 = vmatpush2.msra.mxu0 %v127
    %539 = vmatprep.subr.mxu0 %v124
    %540 = vmatpush2.msra.mxu0 %v123
    %541 = vmatprep.mubr.f32.mxu0 %v53
    %542 = vmatmul.mubr.f32.gmra.mxu0 %v52
    %v543 = vpop.f32.mrf.mxu0
    %v544 = vadd.f32 %v456, %v543
    %v545 = vpop.f32.mrf.mxu0
    %v546 = vadd.f32 %v460, %v545
    %547 = vdwg.mxu0
    %548 = vmatprep.subr.mxu0 %v248
    %549 = vmatpush1.msra.mxu0 %v247
    %550 = vmatprep.subr.mxu0 %v244
    %551 = vmatpush1.msra.mxu0 %v243
    %552 = vmatprep.subr.mxu0 %v240
    %553 = vmatpush1.msra.mxu0 %v239
    %554 = vmatprep.subr.mxu0 %v236
    %555 = vmatpush1.msra.mxu0 %v235
    %556 = vmatprep.subr.mxu0 %v232
    %557 = vmatpush1.msra.mxu0 %v231
    %558 = vmatprep.subr.mxu0 %v228
    %559 = vmatpush1.msra.mxu0 %v227
    %560 = vmatprep.subr.mxu0 %v224
    %561 = vmatpush1.msra.mxu0 %v223
    %562 = vmatprep.subr.mxu0 %v220
    %563 = vmatpush1.msra.mxu0 %v219
    %564 = vmatprep.subr.mxu0 %v216
    %565 = vmatpush1.msra.mxu0 %v215
    %566 = vmatprep.subr.mxu0 %v212
    %567 = vmatpush1.msra.mxu0 %v211
    %568 = vmatprep.subr.mxu0 %v208
    %569 = vmatpush1.msra.mxu0 %v207
    %570 = vmatprep.subr.mxu0 %v204
    %571 = vmatpush1.msra.mxu0 %v203
    %572 = vmatprep.subr.mxu0 %v200
    %573 = vmatpush1.msra.mxu0 %v199
    %574 = vmatprep.subr.mxu0 %v196
    %575 = vmatpush1.msra.mxu0 %v195
    %576 = vmatprep.subr.mxu0 %v192
    %577 = vmatpush1.msra.mxu0 %v191
    %578 = vmatprep.subr.mxu0 %v188
    %579 = vmatpush1.msra.mxu0 %v187
    %580 = vmatprep.subr.mxu0 %v312
    %581 = vmatpush2.msra.mxu0 %v311
    %582 = vmatprep.subr.mxu0 %v308
    %583 = vmatpush2.msra.mxu0 %v307
    %584 = vmatprep.subr.mxu0 %v304
    %585 = vmatpush2.msra.mxu0 %v303
    %586 = vmatprep.subr.mxu0 %v300
    %587 = vmatpush2.msra.mxu0 %v299
    %588 = vmatprep.subr.mxu0 %v296
    %589 = vmatpush2.msra.mxu0 %v295
    %590 = vmatprep.subr.mxu0 %v292
    %591 = vmatpush2.msra.mxu0 %v291
    %592 = vmatprep.subr.mxu0 %v288
    %593 = vmatpush2.msra.mxu0 %v287
    %594 = vmatprep.subr.mxu0 %v284
    %595 = vmatpush2.msra.mxu0 %v283
    %596 = vmatprep.subr.mxu0 %v280
    %597 = vmatpush2.msra.mxu0 %v279
    %598 = vmatprep.subr.mxu0 %v276
    %599 = vmatpush2.msra.mxu0 %v275
    %600 = vmatprep.subr.mxu0 %v272
    %601 = vmatpush2.msra.mxu0 %v271
    %602 = vmatprep.subr.mxu0 %v268
    %603 = vmatpush2.msra.mxu0 %v267
    %604 = vmatprep.subr.mxu0 %v264
    %605 = vmatpush2.msra.mxu0 %v263
    %606 = vmatprep.subr.mxu0 %v260
    %607 = vmatpush2.msra.mxu0 %v259
    %608 = vmatprep.subr.mxu0 %v256
    %609 = vmatpush2.msra.mxu0 %v255
    %610 = vmatprep.subr.mxu0 %v252
    %611 = vmatpush2.msra.mxu0 %v251
    %612 = vmatprep.mubr.f32.mxu0 %v55
    %613 = vmatmul.mubr.f32.gmra.mxu0 %v54
    %v614 = vpop.f32.mrf.mxu0
    %v615 = vadd.f32 %v544, %v614
    %v616 = vpop.f32.mrf.mxu0
    %v617 = vadd.f32 %v546, %v616
    %618 = vdwg.mxu0
    %619 = vmatprep.subr.mxu0 %v376
    %620 = vmatpush1.msra.mxu0 %v375
    %621 = vmatprep.subr.mxu0 %v372
    %622 = vmatpush1.msra.mxu0 %v371
    %623 = vmatprep.subr.mxu0 %v368
    %624 = vmatpush1.msra.mxu0 %v367
    %625 = vmatprep.subr.mxu0 %v364
    %626 = vmatpush1.msra.mxu0 %v363
    %627 = vmatprep.subr.mxu0 %v360
    %628 = vmatpush1.msra.mxu0 %v359
    %629 = vmatprep.subr.mxu0 %v356
    %630 = vmatpush1.msra.mxu0 %v355
    %631 = vmatprep.subr.mxu0 %v352
    %632 = vmatpush1.msra.mxu0 %v351
    %633 = vmatprep.subr.mxu0 %v348
    %634 = vmatpush1.msra.mxu0 %v347
    %635 = vmatprep.subr.mxu0 %v344
    %636 = vmatpush1.msra.mxu0 %v343
    %637 = vmatprep.subr.mxu0 %v340
    %638 = vmatpush1.msra.mxu0 %v339
    %639 = vmatprep.subr.mxu0 %v336
    %640 = vmatpush1.msra.mxu0 %v335
    %641 = vmatprep.subr.mxu0 %v332
    %642 = vmatpush1.msra.mxu0 %v331
    %643 = vmatprep.subr.mxu0 %v328
    %644 = vmatpush1.msra.mxu0 %v327
    %645 = vmatprep.subr.mxu0 %v324
    %646 = vmatpush1.msra.mxu0 %v323
    %647 = vmatprep.subr.mxu0 %v320
    %648 = vmatpush1.msra.mxu0 %v319
    %649 = vmatprep.subr.mxu0 %v316
    %650 = vmatpush1.msra.mxu0 %v315
    %651 = vmatprep.subr.mxu0 %v440
    %652 = vmatpush2.msra.mxu0 %v439
    %653 = vmatprep.subr.mxu0 %v436
    %654 = vmatpush2.msra.mxu0 %v435
    %655 = vmatprep.subr.mxu0 %v432
    %656 = vmatpush2.msra.mxu0 %v431
    %657 = vmatprep.subr.mxu0 %v428
    %658 = vmatpush2.msra.mxu0 %v427
    %659 = vmatprep.subr.mxu0 %v424
    %660 = vmatpush2.msra.mxu0 %v423
    %661 = vmatprep.subr.mxu0 %v420
    %662 = vmatpush2.msra.mxu0 %v419
    %663 = vmatprep.subr.mxu0 %v416
    %664 = vmatpush2.msra.mxu0 %v415
    %665 = vmatprep.subr.mxu0 %v412
    %666 = vmatpush2.msra.mxu0 %v411
    %667 = vmatprep.subr.mxu0 %v408
    %668 = vmatpush2.msra.mxu0 %v407
    %669 = vmatprep.subr.mxu0 %v404
    %670 = vmatpush2.msra.mxu0 %v403
    %671 = vmatprep.subr.mxu0 %v400
    %672 = vmatpush2.msra.mxu0 %v399
    %673 = vmatprep.subr.mxu0 %v396
    %674 = vmatpush2.msra.mxu0 %v395
    %675 = vmatprep.subr.mxu0 %v392
    %676 = vmatpush2.msra.mxu0 %v391
    %677 = vmatprep.subr.mxu0 %v388
    %678 = vmatpush2.msra.mxu0 %v387
    %679 = vmatprep.subr.mxu0 %v384
    %680 = vmatpush2.msra.mxu0 %v383
    %681 = vmatprep.subr.mxu0 %v380
    %682 = vmatpush2.msra.mxu0 %v379
    %683 = vmatprep.mubr.f32.mxu0 %v57
    %684 = vmatmul.mubr.f32.gmra.mxu0 %v56
    %v685 = vpop.f32.mrf.mxu0
    %v686 = vadd.f32 %v615, %v685
    %v687 = vpop.f32.mrf.mxu0
    %v688 = vadd.f32 %v617, %v687
    %689 = vdwg.mxu0
    %690 = vmatprep.subr.mxu0 0.0
    %691 = vmatpush1.msra.mxu0 0.0
    %692 = vmatprep.subr.mxu0 0.0
    %693 = vmatpush1.msra.mxu0 0.0
    %694 = vmatprep.subr.mxu0 0.0
    %695 = vmatpush1.msra.mxu0 0.0
    %696 = vmatprep.subr.mxu0 0.0
    %697 = vmatpush1.msra.mxu0 0.0
    %698 = vmatprep.subr.mxu0 0.0
    %699 = vmatpush1.msra.mxu0 0.0
    %700 = vmatprep.subr.mxu0 0.0
    %701 = vmatpush1.msra.mxu0 0.0
    %702 = vmatprep.subr.mxu0 0.0
    %703 = vmatpush1.msra.mxu0 0.0
    %704 = vmatprep.subr.mxu0 0.0
    %705 = vmatpush1.msra.mxu0 0.0
    %706 = vmatprep.subr.mxu0 0.0
    %707 = vmatpush1.msra.mxu0 0.0
    %708 = vmatprep.subr.mxu0 0.0
    %709 = vmatpush1.msra.mxu0 0.0
    %710 = vmatprep.subr.mxu0 0.0
    %711 = vmatpush1.msra.mxu0 0.0
    %712 = vmatprep.subr.mxu0 0.0
    %713 = vmatpush1.msra.mxu0 0.0
    %714 = vmatprep.subr.mxu0 0.0
    %715 = vmatpush1.msra.mxu0 0.0
    %716 = vmatprep.subr.mxu0 0.0
    %717 = vmatpush1.msra.mxu0 0.0
    %718 = vmatprep.subr.mxu0 %v448
    %719 = vmatpush1.msra.mxu0 %v447
    %720 = vmatprep.subr.mxu0 %v444
    %721 = vmatpush1.msra.mxu0 %v443
    %722 = vmatprep.subr.mxu0 0.0
    %723 = vmatpush2.msra.mxu0 0.0
    %724 = vmatprep.subr.mxu0 0.0
    %725 = vmatpush2.msra.mxu0 0.0
    %726 = vmatprep.subr.mxu0 0.0
    %727 = vmatpush2.msra.mxu0 0.0
    %728 = vmatprep.subr.mxu0 0.0
    %729 = vmatpush2.msra.mxu0 0.0
    %730 = vmatprep.subr.mxu0 0.0
    %731 = vmatpush2.msra.mxu0 0.0
    %732 = vmatprep.subr.mxu0 0.0
    %733 = vmatpush2.msra.mxu0 0.0
    %734 = vmatprep.subr.mxu0 0.0
    %735 = vmatpush2.msra.mxu0 0.0
    %736 = vmatprep.subr.mxu0 0.0
    %737 = vmatpush2.msra.mxu0 0.0
    %738 = vmatprep.subr.mxu0 0.0
    %739 = vmatpush2.msra.mxu0 0.0
    %740 = vmatprep.subr.mxu0 0.0
    %741 = vmatpush2.msra.mxu0 0.0
    %742 = vmatprep.subr.mxu0 0.0
    %743 = vmatpush2.msra.mxu0 0.0
    %744 = vmatprep.subr.mxu0 0.0
    %745 = vmatpush2.msra.mxu0 0.0
    %746 = vmatprep.subr.mxu0 0.0
    %747 = vmatpush2.msra.mxu0 0.0
    %748 = vmatprep.subr.mxu0 0.0
    %749 = vmatpush2.msra.mxu0 0.0
    %750 = vmatprep.subr.mxu0 0.0
    %751 = vmatpush2.msra.mxu0 0.0
    %752 = vmatprep.subr.mxu0 0.0
    %753 = vmatpush2.msra.mxu0 0.0
    %754 = vmatprep.mubr.f32.mxu0 0.0
    %755 = vmatmul.mubr.f32.gmra.mxu0 %v475
    %v756 = vpop.f32.mrf.mxu0
    %v757 = vadd.f32 %v686, %v756
    %v758 = vpop.f32.mrf.mxu0
    %v759 = vadd.f32 %v688, %v758
    %760 = vdwg.mxu0
    %761 = vmatprep.subr.mxu0 %v122
    %762 = vmatpush1.msra.mxu0 %v121
    %763 = vmatprep.subr.mxu0 %v118
    %764 = vmatpush1.msra.mxu0 %v117
    %765 = vmatprep.subr.mxu0 %v114
    %766 = vmatpush1.msra.mxu0 %v113
    %767 = vmatprep.subr.mxu0 %v110
    %768 = vmatpush1.msra.mxu0 %v109
    %769 = vmatprep.subr.mxu0 %v106
    %770 = vmatpush1.msra.mxu0 %v105
    %771 = vmatprep.subr.mxu0 %v102
    %772 = vmatpush1.msra.mxu0 %v101
    %773 = vmatprep.subr.mxu0 %v98
    %774 = vmatpush1.msra.mxu0 %v97
    %775 = vmatprep.subr.mxu0 %v94
    %776 = vmatpush1.msra.mxu0 %v93
    %777 = vmatprep.subr.mxu0 %v90
    %778 = vmatpush1.msra.mxu0 %v89
    %779 = vmatprep.subr.mxu0 %v86
    %780 = vmatpush1.msra.mxu0 %v85
    %781 = vmatprep.subr.mxu0 %v82
    %782 = vmatpush1.msra.mxu0 %v81
    %783 = vmatprep.subr.mxu0 %v78
    %784 = vmatpush1.msra.mxu0 %v77
    %785 = vmatprep.subr.mxu0 %v74
    %786 = vmatpush1.msra.mxu0 %v73
    %787 = vmatprep.subr.mxu0 %v70
    %788 = vmatpush1.msra.mxu0 %v69
    %789 = vmatprep.subr.mxu0 %v66
    %790 = vmatpush1.msra.mxu0 %v65
    %791 = vmatprep.subr.mxu0 %v62
    %792 = vmatpush1.msra.mxu0 %v61
    %793 = vmatprep.subr.mxu0 %v186
    %794 = vmatpush2.msra.mxu0 %v185
    %795 = vmatprep.subr.mxu0 %v182
    %796 = vmatpush2.msra.mxu0 %v181
    %797 = vmatprep.subr.mxu0 %v178
    %798 = vmatpush2.msra.mxu0 %v177
    %799 = vmatprep.subr.mxu0 %v174
    %800 = vmatpush2.msra.mxu0 %v173
    %801 = vmatprep.subr.mxu0 %v170
    %802 = vmatpush2.msra.mxu0 %v169
    %803 = vmatprep.subr.mxu0 %v166
    %804 = vmatpush2.msra.mxu0 %v165
    %805 = vmatprep.subr.mxu0 %v162
    %806 = vmatpush2.msra.mxu0 %v161
    %807 = vmatprep.subr.mxu0 %v158
    %808 = vmatpush2.msra.mxu0 %v157
    %809 = vmatprep.subr.mxu0 %v154
    %810 = vmatpush2.msra.mxu0 %v153
    %811 = vmatprep.subr.mxu0 %v150
    %812 = vmatpush2.msra.mxu0 %v149
    %813 = vmatprep.subr.mxu0 %v146
    %814 = vmatpush2.msra.mxu0 %v145
    %815 = vmatprep.subr.mxu0 %v142
    %816 = vmatpush2.msra.mxu0 %v141
    %817 = vmatprep.subr.mxu0 %v138
    %818 = vmatpush2.msra.mxu0 %v137
    %819 = vmatprep.subr.mxu0 %v134
    %820 = vmatpush2.msra.mxu0 %v133
    %821 = vmatprep.subr.mxu0 %v130
    %822 = vmatpush2.msra.mxu0 %v129
    %823 = vmatprep.subr.mxu0 %v126
    %824 = vmatpush2.msra.mxu0 %v125
    %825 = vmatprep.mubr.f32.mxu0 %v53
    %826 = vmatmul.mubr.f32.gmra.mxu0 %v52
    %v827 = vpop.f32.mrf.mxu0
    %v828 = vadd.f32 %v464, %v827
    %v829 = vpop.f32.mrf.mxu0
    %v830 = vadd.f32 %v468, %v829
    %831 = vdwg.mxu0
    %832 = vmatprep.subr.mxu0 %v250
    %833 = vmatpush1.msra.mxu0 %v249
    %834 = vmatprep.subr.mxu0 %v246
    %835 = vmatpush1.msra.mxu0 %v245
    %836 = vmatprep.subr.mxu0 %v242
    %837 = vmatpush1.msra.mxu0 %v241
    %838 = vmatprep.subr.mxu0 %v238
    %839 = vmatpush1.msra.mxu0 %v237
    %840 = vmatprep.subr.mxu0 %v234
    %841 = vmatpush1.msra.mxu0 %v233
    %842 = vmatprep.subr.mxu0 %v230
    %843 = vmatpush1.msra.mxu0 %v229
    %844 = vmatprep.subr.mxu0 %v226
    %845 = vmatpush1.msra.mxu0 %v225
    %846 = vmatprep.subr.mxu0 %v222
    %847 = vmatpush1.msra.mxu0 %v221
    %848 = vmatprep.subr.mxu0 %v218
    %849 = vmatpush1.msra.mxu0 %v217
    %850 = vmatprep.subr.mxu0 %v214
    %851 = vmatpush1.msra.mxu0 %v213
    %852 = vmatprep.subr.mxu0 %v210
    %853 = vmatpush1.msra.mxu0 %v209
    %854 = vmatprep.subr.mxu0 %v206
    %855 = vmatpush1.msra.mxu0 %v205
    %856 = vmatprep.subr.mxu0 %v202
    %857 = vmatpush1.msra.mxu0 %v201
    %858 = vmatprep.subr.mxu0 %v198
    %859 = vmatpush1.msra.mxu0 %v197
    %860 = vmatprep.subr.mxu0 %v194
    %861 = vmatpush1.msra.mxu0 %v193
    %862 = vmatprep.subr.mxu0 %v190
    %863 = vmatpush1.msra.mxu0 %v189
    %864 = vmatprep.subr.mxu0 %v314
    %865 = vmatpush2.msra.mxu0 %v313
    %866 = vmatprep.subr.mxu0 %v310
    %867 = vmatpush2.msra.mxu0 %v309
    %868 = vmatprep.subr.mxu0 %v306
    %869 = vmatpush2.msra.mxu0 %v305
    %870 = vmatprep.subr.mxu0 %v302
    %871 = vmatpush2.msra.mxu0 %v301
    %872 = vmatprep.subr.mxu0 %v298
    %873 = vmatpush2.msra.mxu0 %v297
    %874 = vmatprep.subr.mxu0 %v294
    %875 = vmatpush2.msra.mxu0 %v293
    %876 = vmatprep.subr.mxu0 %v290
    %877 = vmatpush2.msra.mxu0 %v289
    %878 = vmatprep.subr.mxu0 %v286
    %879 = vmatpush2.msra.mxu0 %v285
    %880 = vmatprep.subr.mxu0 %v282
    %881 = vmatpush2.msra.mxu0 %v281
    %882 = vmatprep.subr.mxu0 %v278
    %883 = vmatpush2.msra.mxu0 %v277
    %884 = vmatprep.subr.mxu0 %v274
    %885 = vmatpush2.msra.mxu0 %v273
    %886 = vmatprep.subr.mxu0 %v270
    %887 = vmatpush2.msra.mxu0 %v269
    %888 = vmatprep.subr.mxu0 %v266
    %889 = vmatpush2.msra.mxu0 %v265
    %890 = vmatprep.subr.mxu0 %v262
    %891 = vmatpush2.msra.mxu0 %v261
    %892 = vmatprep.subr.mxu0 %v258
    %893 = vmatpush2.msra.mxu0 %v257
    %894 = vmatprep.subr.mxu0 %v254
    %895 = vmatpush2.msra.mxu0 %v253
    %896 = vmatprep.mubr.f32.mxu0 %v55
    %897 = vmatmul.mubr.f32.gmra.mxu0 %v54
    %v898 = vpop.f32.mrf.mxu0
    %v899 = vadd.f32 %v828, %v898
    %v900 = vpop.f32.mrf.mxu0
    %v901 = vadd.f32 %v830, %v900
    %902 = vdwg.mxu0
    %903 = vmatprep.subr.mxu0 %v378
    %904 = vmatpush1.msra.mxu0 %v377
    %905 = vmatprep.subr.mxu0 %v374
    %906 = vmatpush1.msra.mxu0 %v373
    %907 = vmatprep.subr.mxu0 %v370
    %908 = vmatpush1.msra.mxu0 %v369
    %909 = vmatprep.subr.mxu0 %v366
    %910 = vmatpush1.msra.mxu0 %v365
    %911 = vmatprep.subr.mxu0 %v362
    %912 = vmatpush1.msra.mxu0 %v361
    %913 = vmatprep.subr.mxu0 %v358
    %914 = vmatpush1.msra.mxu0 %v357
    %915 = vmatprep.subr.mxu0 %v354
    %916 = vmatpush1.msra.mxu0 %v353
    %917 = vmatprep.subr.mxu0 %v350
    %918 = vmatpush1.msra.mxu0 %v349
    %919 = vmatprep.subr.mxu0 %v346
    %920 = vmatpush1.msra.mxu0 %v345
    %921 = vmatprep.subr.mxu0 %v342
    %922 = vmatpush1.msra.mxu0 %v341
    %923 = vmatprep.subr.mxu0 %v338
    %924 = vmatpush1.msra.mxu0 %v337
    %925 = vmatprep.subr.mxu0 %v334
    %926 = vmatpush1.msra.mxu0 %v333
    %927 = vmatprep.subr.mxu0 %v330
    %928 = vmatpush1.msra.mxu0 %v329
    %929 = vmatprep.subr.mxu0 %v326
    %930 = vmatpush1.msra.mxu0 %v325
    %931 = vmatprep.subr.mxu0 %v322
    %932 = vmatpush1.msra.mxu0 %v321
    %933 = vmatprep.subr.mxu0 %v318
    %934 = vmatpush1.msra.mxu0 %v317
    %935 = vmatprep.subr.mxu0 %v442
    %936 = vmatpush2.msra.mxu0 %v441
    %937 = vmatprep.subr.mxu0 %v438
    %938 = vmatpush2.msra.mxu0 %v437
    %939 = vmatprep.subr.mxu0 %v434
    %940 = vmatpush2.msra.mxu0 %v433
    %941 = vmatprep.subr.mxu0 %v430
    %942 = vmatpush2.msra.mxu0 %v429
    %943 = vmatprep.subr.mxu0 %v426
    %944 = vmatpush2.msra.mxu0 %v425
    %945 = vmatprep.subr.mxu0 %v422
    %946 = vmatpush2.msra.mxu0 %v421
    %947 = vmatprep.subr.mxu0 %v418
    %948 = vmatpush2.msra.mxu0 %v417
    %949 = vmatprep.subr.mxu0 %v414
    %950 = vmatpush2.msra.mxu0 %v413
    %951 = vmatprep.subr.mxu0 %v410
    %952 = vmatpush2.msra.mxu0 %v409
    %953 = vmatprep.subr.mxu0 %v406
    %954 = vmatpush2.msra.mxu0 %v405
    %955 = vmatprep.subr.mxu0 %v402
    %956 = vmatpush2.msra.mxu0 %v401
    %957 = vmatprep.subr.mxu0 %v398
    %958 = vmatpush2.msra.mxu0 %v397
    %959 = vmatprep.subr.mxu0 %v394
    %960 = vmatpush2.msra.mxu0 %v393
    %961 = vmatprep.subr.mxu0 %v390
    %962 = vmatpush2.msra.mxu0 %v389
    %963 = vmatprep.subr.mxu0 %v386
    %964 = vmatpush2.msra.mxu0 %v385
    %965 = vmatprep.subr.mxu0 %v382
    %966 = vmatpush2.msra.mxu0 %v381
    %967 = vmatprep.mubr.f32.mxu0 %v57
    %968 = vmatmul.mubr.f32.gmra.mxu0 %v56
    %v969 = vpop.f32.mrf.mxu0
    %v970 = vadd.f32 %v899, %v969
    %v971 = vpop.f32.mrf.mxu0
    %v972 = vadd.f32 %v901, %v971
    %973 = vdwg.mxu0
    %974 = vmatprep.subr.mxu0 0.0
    %975 = vmatpush1.msra.mxu0 0.0
    %976 = vmatprep.subr.mxu0 0.0
    %977 = vmatpush1.msra.mxu0 0.0
    %978 = vmatprep.subr.mxu0 0.0
    %979 = vmatpush1.msra.mxu0 0.0
    %980 = vmatprep.subr.mxu0 0.0
    %981 = vmatpush1.msra.mxu0 0.0
    %982 = vmatprep.subr.mxu0 0.0
    %983 = vmatpush1.msra.mxu0 0.0
    %984 = vmatprep.subr.mxu0 0.0
    %985 = vmatpush1.msra.mxu0 0.0
    %986 = vmatprep.subr.mxu0 0.0
    %987 = vmatpush1.msra.mxu0 0.0
    %988 = vmatprep.subr.mxu0 0.0
    %989 = vmatpush1.msra.mxu0 0.0
    %990 = vmatprep.subr.mxu0 0.0
    %991 = vmatpush1.msra.mxu0 0.0
    %992 = vmatprep.subr.mxu0 0.0
    %993 = vmatpush1.msra.mxu0 0.0
    %994 = vmatprep.subr.mxu0 0.0
    %995 = vmatpush1.msra.mxu0 0.0
    %996 = vmatprep.subr.mxu0 0.0
    %997 = vmatpush1.msra.mxu0 0.0
    %998 = vmatprep.subr.mxu0 0.0
    %999 = vmatpush1.msra.mxu0 0.0
    %1000 = vmatprep.subr.mxu0 0.0
    %1001 = vmatpush1.msra.mxu0 0.0
    %1002 = vmatprep.subr.mxu0 %v450
    %1003 = vmatpush1.msra.mxu0 %v449
    %1004 = vmatprep.subr.mxu0 %v446
    %1005 = vmatpush1.msra.mxu0 %v445
    %1006 = vmatprep.subr.mxu0 0.0
    %1007 = vmatpush2.msra.mxu0 0.0
    %1008 = vmatprep.subr.mxu0 0.0
    %1009 = vmatpush2.msra.mxu0 0.0
    %1010 = vmatprep.subr.mxu0 0.0
    %1011 = vmatpush2.msra.mxu0 0.0
    %1012 = vmatprep.subr.mxu0 0.0
    %1013 = vmatpush2.msra.mxu0 0.0
    %1014 = vmatprep.subr.mxu0 0.0
    %1015 = vmatpush2.msra.mxu0 0.0
    %1016 = vmatprep.subr.mxu0 0.0
    %1017 = vmatpush2.msra.mxu0 0.0
    %1018 = vmatprep.subr.mxu0 0.0
    %1019 = vmatpush2.msra.mxu0 0.0
    %1020 = vmatprep.subr.mxu0 0.0
    %1021 = vmatpush2.msra.mxu0 0.0
    %1022 = vmatprep.subr.mxu0 0.0
    %1023 = vmatpush2.msra.mxu0 0.0
    %1024 = vmatprep.subr.mxu0 0.0
    %1025 = vmatpush2.msra.mxu0 0.0
    %1026 = vmatprep.subr.mxu0 0.0
    %1027 = vmatpush2.msra.mxu0 0.0
    %1028 = vmatprep.subr.mxu0 0.0
    %1029 = vmatpush2.msra.mxu0 0.0
    %1030 = vmatprep.subr.mxu0 0.0
    %1031 = vmatpush2.msra.mxu0 0.0
    %1032 = vmatprep.subr.mxu0 0.0
    %1033 = vmatpush2.msra.mxu0 0.0
    %1034 = vmatprep.subr.mxu0 0.0
    %1035 = vmatpush2.msra.mxu0 0.0
    %1036 = vmatprep.subr.mxu0 0.0
    %1037 = vmatpush2.msra.mxu0 0.0
    %1038 = vmatprep.mubr.f32.mxu0 0.0
    %1039 = vmatmul.mubr.f32.gmra.mxu0 %v475
    %v1040 = vpop.f32.mrf.mxu0
    %v1041 = vadd.f32 %v970, %v1040
    %v1042 = vpop.f32.mrf.mxu0
    %v1043 = vadd.f32 %v972, %v1042
    %1044 = vdwg.mxu0
    %1045 = vst [vmem:[#allocation8] sm:$0xff] %v757
    %1046 = vst [vmem:[#allocation8 + $0x8] sm:$0xff] %v759
    %1047 = vst [vmem:[#allocation8 + $0x10] sm:$0xff] %v1041
    %vm1048 = vcmask 949248
    %1049 = vst.msk [vmem:[#allocation8 + $0x18] sm:$0xff] %vm1048, %v1043
    // Predicated region
    $region26: #{_neural_net_forward.1} parent=1 // pred_check
      _
    $region27: #{_neural_net_forward.1} parent=1 // pred_check_branch
      %1051 = sbr.rel (0) target = $region29
    $region28: #{_neural_net_forward.1} parent=1 // pred_region
      %s1053 = ssub.s32 512, 512
      %1054 = vsyncadd [#allocation4], %s1053
      %s1056 = sshll.u32 [#allocation8], 4
      %s1057 = int_to_ptr.vmem [resolvable:$true] %s1056
      %1059 = dma.vmem_to_hbm [thread:$0]  %s1057, 512, %s3, [#allocation4]
    $region29: #{_neural_net_forward.1} parent=1 // pred_fallthru
      _
    // Predicated region
    $region30: #{_neural_net_forward.1} parent=1 // pred_check
      _
    $region31: #{_neural_net_forward.1} parent=1 // pred_check_branch
      %1061 = sbr.rel (0) target = $region33
    $region32: #{_neural_net_forward.1} parent=1 // pred_region
      %1062 = dma.done [#allocation4], 512
    $region33: #{_neural_net_forward.1} parent=1 // pred_fallthru
      _
    %1063 = vsyncpa [#allocation3], 1
    %1064 = vsyncpa [#allocation6], 1
    %1065 = vsyncpa [#allocation4], 1

</llo_original>
